<compile_context>
chip_gen: v6e
topology: v6e:2x2x1
jax: 0.10.0
libtpu: 0.0.40
codegen_flags: <defaults>
</compile_context>

<pallas_src>
import jax
import jax.numpy as jnp
from jax import lax
from jax.experimental import pallas as pl
from jax.experimental.pallas import tpu as pltpu


def cross_score_kernel(pix_ref, wimg_ref, txt_ref, wtxt_ref, out_ref,
                       img_acc_ref, txt_emb_ref, txt_norm2_ref):
    """Grid axis 0 = reduction over d_pix tiles.

    pix_ref      : (1, tile_k)      bf16   (K-tile of the flattened pixels)
    wimg_ref     : (tile_k, d_emb)  bf16   (K-tile of the image projection)
    txt_ref      : (n_pad, d_txt)   bf16   (resident; same block every step)
    wtxt_ref     : (d_txt, d_emb)   bf16   (resident)
    out_ref      : (1, n_pad)       f32    (resident, lane-dense score row)
    img_acc_ref  : (1, d_emb)       f32    VMEM accumulator
    txt_emb_ref  : (n_pad, d_emb)   bf16   VMEM cache of text embeddings
    txt_norm2_ref: (1, n_pad)       f32    VMEM cache of text squared norms
    """
    k = pl.program_id(0)

    @pl.when(k == 0)
    def _init():
        img_acc_ref[...] = jnp.zeros_like(img_acc_ref)
        # Text tower computed once at step 0 so it hides under the w_img HBM
        # stream (MXU is nearly idle during the DMA-bound K loop).
        txt_embed = jnp.dot(txt_ref[...], wtxt_ref[...],
                            preferred_element_type=jnp.float32)      # (N, D) f32
        txt_emb_ref[...] = txt_embed.astype(jnp.bfloat16)
        # Lane-dense (1, N) squared norms via the MXU: contract the last axes
        # of ones(1,D) and sq(N,D) — no explicit .T / relayout.
        ones = jnp.ones((1, txt_embed.shape[-1]), jnp.float32)
        txt_norm2_ref[...] = lax.dot_general(
            ones, txt_embed * txt_embed,
            dimension_numbers=(((1,), (1,)), ((), ())),
            preferred_element_type=jnp.float32)                       # (1, N)

    # Image tower partial: (1, tile_k) @ (tile_k, D) -> accumulate in f32.
    img_acc_ref[...] += jnp.dot(pix_ref[...], wimg_ref[...],
                                preferred_element_type=jnp.float32)

    @pl.when(k == pl.num_programs(0) - 1)
    def _finalize():
        img_embed = img_acc_ref[...]                                  # (1, D) f32
        # Numerator: bf16 MXU inputs (single-pass), f32 accumulation, contract
        # last axes of both operands (no transpose of the (N, D) tensor).
        num = lax.dot_general(
            img_embed.astype(jnp.bfloat16), txt_emb_ref[...],
            dimension_numbers=(((1,), (1,)), ((), ())),
            preferred_element_type=jnp.float32)                       # (1, N)
        img_norm2 = jnp.sum(img_embed * img_embed, axis=-1,
                            keepdims=True)                            # (1, 1) f32
        # torch.nn.CosineSimilarity: dot / max(||a||*||b||, 1e-8).  Squared
        # clamp (1e-8)**2 = 1e-16 + rsqrt preserves those semantics exactly.
        denom2 = jnp.maximum(txt_norm2_ref[...] * img_norm2, 1e-16)
        out_ref[...] = num * lax.rsqrt(denom2)                        # (1, N) f32


def prepare_cross_score_weights(w_img, w_txt, *, tile_k=8192):
    """One-time (weight-load time) prep: bf16 cast + zero-pad of the image
    projection along d_pix.  Doing this per forward would add a full extra
    HBM pass over the largest tensor — the kernel's dominant traffic."""
    d_pix, d_emb = w_img.shape
    lane = 128
    tile_k = max(lane, (int(tile_k) // lane) * lane)
    # Cap so each bf16 w_img tile stays <= ~20 MiB (two pipeline buffers
    # ~40 MiB), safely inside v7x's 64 MiB physical VMEM per TensorCore.
    max_tile_elems = (20 << 20) // (2 * d_emb)
    tile_k = min(tile_k, max(lane, (max_tile_elems // lane) * lane))
    tile_k = min(tile_k, pl.cdiv(d_pix, lane) * lane)
    n_k = pl.cdiv(d_pix, tile_k)
    d_pix_pad = n_k * tile_k

    # Explicit zero-pad of the reduction axis (do NOT rely on Pallas handling
    # a ragged last K tile — the OOB region would corrupt the accumulator).
    wimg_bf = jnp.zeros((d_pix_pad, d_emb), jnp.bfloat16)
    wimg_bf = wimg_bf.at[:d_pix, :].set(w_img.astype(jnp.bfloat16))
    wtxt_bf = w_txt.astype(jnp.bfloat16)
    return dict(wimg=wimg_bf, wtxt=wtxt_bf, tile_k=tile_k,
                d_pix=d_pix, d_emb=d_emb)


def cross_score_forward(pixel_values, text_features, weights, batch, num_sequences):
    """pixel_values:  (1, C, H, W)  NCHW (one image, PyTorch convention)
       text_features: (batch * num_sequences, d_txt)
       weights:       output of prepare_cross_score_weights
       returns:       (batch, num_sequences) cosine scores (outputs.view(B, num_seq))
    """
    wimg_bf, wtxt_bf = weights["wimg"], weights["wtxt"]
    tile_k, d_pix, d_emb = weights["tile_k"], weights["d_pix"], weights["d_emb"]
    d_pix_pad = wimg_bf.shape[0]
    n_k = d_pix_pad // tile_k

    n_img = pixel_values.shape[0]
    assert n_img == 1, "CrossScore scores one image against B*num_seq captions"
    pix_flat = pixel_values.reshape(n_img, -1)
    assert pix_flat.shape[1] == d_pix

    # Per-call pixel prep is tiny (one row): bf16 cast + zero-pad to the
    # padded reduction length.
    pix_bf = jnp.zeros((n_img, d_pix_pad), jnp.bfloat16)
    pix_bf = pix_bf.at[:, :d_pix].set(pix_flat.astype(jnp.bfloat16))

    # Pad n_txt to a lane-dense multiple of 128: unmasked output stores and
    # aligned text-tower MXU shapes.  Padded rows score exactly 0 and are
    # sliced off below.
    n_txt, d_txt = text_features.shape
    n_pad = pl.cdiv(n_txt, 128) * 128
    txt_bf = jnp.zeros((n_pad, d_txt), jnp.bfloat16)
    txt_bf = txt_bf.at[:n_txt, :].set(text_features.astype(jnp.bfloat16))

    # Explicit scoped-VMEM budget: double-buffered streaming tiles + resident
    # text blocks + scratch, with margin; capped at v7x's 64 MiB physical VMEM
    # (also covers raising v5e's 16 MiB scoped default for large tile_k).
    vmem_bytes = 2 * (n_img * tile_k * 2 + tile_k * d_emb * 2)        # pix + w_img tiles
    vmem_bytes += 2 * (n_pad * d_txt * 2 + d_txt * d_emb * 2 + n_pad * 4)  # resident txt/wtxt/out
    vmem_bytes += n_img * d_emb * 4 + n_pad * d_emb * 2 + n_pad * 4   # scratch
    vmem_limit = int(min(max(vmem_bytes + (4 << 20), 32 << 20), 64 << 20))

    out = pl.pallas_call(
        cross_score_kernel,
        out_shape=jax.ShapeDtypeStruct((1, n_pad), jnp.float32),
        grid=(n_k,),
        in_specs=[
            pl.BlockSpec((n_img, tile_k), lambda k: (0, k)),   # pixel K-chunk
            pl.BlockSpec((tile_k, d_emb), lambda k: (k, 0)),   # w_img K-tile (streamed)
            pl.BlockSpec((n_pad, d_txt), lambda k: (0, 0)),    # text features (resident)
            pl.BlockSpec((d_txt, d_emb), lambda k: (0, 0)),    # w_txt (resident)
        ],
        out_specs=pl.BlockSpec((1, n_pad), lambda k: (0, 0)),  # resident lane-dense row
        scratch_shapes=[
            pltpu.VMEM((n_img, d_emb), jnp.float32),   # image-embed accumulator
            pltpu.VMEM((n_pad, d_emb), jnp.bfloat16),  # cached text embeddings (bf16)
            pltpu.VMEM((1, n_pad), jnp.float32),       # cached text squared norms
        ],
        compiler_params=pltpu.CompilerParams(
            dimension_semantics=("arbitrary",),        # K is a reduction axis
            vmem_limit_bytes=vmem_limit),
    )(pix_bf, wimg_bf, txt_bf, wtxt_bf)

    # TODO(synk): on v7x, add a leading "parallel" grid axis (split d_emb or
    # 128-row text tiles across the two TensorCores) to use the second TC;
    # no-op on v5e/v6e (1 TC per chip).
    return out[0, :n_txt].reshape(batch, num_sequences)


if __name__ == "__main__":
    # Small synthetic shapes consistent with the module's 'gen' forward path:
    # one image, B=2 caption groups, num_sequences=4 candidates each.
    B, NUM_SEQ = 2, 4
    C, H, W = 3, 16, 16
    D_TXT, D_EMB = 128, 128
    N_TXT = B * NUM_SEQ
    D_PIX = C * H * W                      # 768 -> 3 K-tiles at tile_k=256

    key = jax.random.PRNGKey(0)
    k_pix, k_txt, k_wimg, k_wtxt = jax.random.split(key, 4)

    pixel_values = jax.random.normal(k_pix, (1, C, H, W), dtype=jnp.float32)
    text_features = jax.random.normal(k_txt, (N_TXT, D_TXT), dtype=jnp.float32)
    # Deterministic "encoder" weights (synthetic stand-in for the checkpoint).
    w_img = jax.random.normal(k_wimg, (D_PIX, D_EMB), dtype=jnp.float32) * 0.02
    w_txt = jax.random.normal(k_wtxt, (D_TXT, D_EMB), dtype=jnp.float32) * 0.02

    # One-time weight prep (hoisted out of the per-call forward).  tile_k=256
    # exercises the multi-step K pipeline at these toy shapes; production
    # default is 8192, auto-capped by the VMEM budget.
    weights = prepare_cross_score_weights(w_img, w_txt, tile_k=256)

    scores = cross_score_forward(pixel_values, text_features, weights, B, NUM_SEQ)
    jax.block_until_ready(scores)

    # Pure-JAX reference with the same bf16-tower / f32-accumulation recipe.
    pix_bf = pixel_values.reshape(1, D_PIX).astype(jnp.bfloat16)
    img_e = jnp.dot(pix_bf, w_img.astype(jnp.bfloat16),
                    preferred_element_type=jnp.float32)
    txt_e = jnp.dot(text_features.astype(jnp.bfloat16), w_txt.astype(jnp.bfloat16),
                    preferred_element_type=jnp.float32)
    ref = (jnp.sum(txt_e * img_e, axis=-1) /
           jnp.maximum(jnp.linalg.norm(txt_e, axis=-1) *
                       jnp.linalg.norm(img_e, axis=-1), 1e-8)
           ).reshape(B, NUM_SEQ)

    assert scores.shape == (B, NUM_SEQ)
    assert jnp.allclose(scores, ref, atol=1e-2, rtol=1e-2), "mismatch vs reference"

    # TODO(synk): the pretrained CLIP/SigLIP/LanguageBind towers and the
    # processor / pixel-cache disk I/O have no Pallas equivalent; they are
    # modeled by deterministic linear projections above.
    print("KERNEL_OK")
</pallas_src>

<mosaic_0001>
module attributes {stable_mosaic.version = 11 : i64} {
  func.func @cross_score_kernel(%arg0: i32, %arg1: memref<1x256xbf16, #tpu.memory_space<vmem>>, %arg2: memref<256x128xbf16, #tpu.memory_space<vmem>>, %arg3: memref<128x128xbf16, #tpu.memory_space<vmem>>, %arg4: memref<128x128xbf16, #tpu.memory_space<vmem>>, %arg5: memref<1x128xf32, #tpu.memory_space<vmem>>, %arg6: memref<1x128xf32, #tpu.memory_space<vmem>>, %arg7: memref<128x128xbf16, #tpu.memory_space<vmem>>, %arg8: memref<1x128xf32, #tpu.memory_space<vmem>>) attributes {dimension_semantics = [#tpu.dimension_semantics<arbitrary>], iteration_bounds = array<i64: 3>, scalar_prefetch = 0 : i64, scratch_operands = 3 : i64, tpu.core_type = #tpu.core_type<tc>, window_params = [{transform_indices = @transform_0, window_bounds = array<i64: 1, 256>}, {transform_indices = @transform_1, window_bounds = array<i64: 256, 128>}, {pipeline_mode = #tpu.pipeline_mode<synchronous>, transform_indices = @transform_2, window_bounds = array<i64: 128, 128>}, {pipeline_mode = #tpu.pipeline_mode<synchronous>, transform_indices = @transform_3, window_bounds = array<i64: 128, 128>}, {pipeline_mode = #tpu.pipeline_mode<synchronous>, transform_indices = @transform_4, window_bounds = array<i64: 1, 128>}]} {
    %c0_i32 = arith.constant 0 : i32
    %0 = arith.cmpi eq, %arg0, %c0_i32 : i32
    %1 = arith.extui %0 : i1 to i32
    %c0_i32_0 = arith.constant 0 : i32
    %2 = arith.cmpi ne, %1, %c0_i32_0 : i32
    scf.if %2 {
      %cst_9 = arith.constant 0.000000e+00 : f32
      %12 = vector.broadcast %cst_9 : f32 to vector<1x128xf32>
      %c0_10 = arith.constant 0 : index
      %c0_11 = arith.constant 0 : index
      %13 = vector.load %arg6[%c0_10, %c0_11] : memref<1x128xf32, #tpu.memory_space<vmem>>, vector<1x128xf32>
      tpu.vector_store %arg6[%c0_10, %c0_11], %12 {strides = array<i32>} : memref<1x128xf32, #tpu.memory_space<vmem>>, vector<1x128xf32>,
      %c0_12 = arith.constant 0 : index
      %c0_13 = arith.constant 0 : index
      %14 = vector.load %arg3[%c0_12, %c0_13] : memref<128x128xbf16, #tpu.memory_space<vmem>>, vector<128x128xbf16>
      %c0_14 = arith.constant 0 : index
      %c0_15 = arith.constant 0 : index
      %15 = vector.load %arg4[%c0_14, %c0_15] : memref<128x128xbf16, #tpu.memory_space<vmem>>, vector<128x128xbf16>
      %cst_16 = arith.constant dense<0.000000e+00> : vector<128x128xf32>
      %16 = tpu.matmul %14, %15, %cst_16 {dimension_numbers = #tpu.dot_dimension_numbers<[1], [0], [0], [1], [0, 0, 1, 1], [], []>} : vector<128x128xbf16>, vector<128x128xbf16>, vector<128x128xf32> -> vector<128x128xf32>
      %17 = arith.truncf %16 : vector<128x128xf32> to vector<128x128xbf16>
      %c0_17 = arith.constant 0 : index
      %c0_18 = arith.constant 0 : index
      %18 = vector.load %arg7[%c0_17, %c0_18] : memref<128x128xbf16, #tpu.memory_space<vmem>>, vector<128x128xbf16>
      tpu.vector_store %arg7[%c0_17, %c0_18], %17 {strides = array<i32>} : memref<128x128xbf16, #tpu.memory_space<vmem>>, vector<128x128xbf16>,
      %cst_19 = arith.constant 1.000000e+00 : f32
      %19 = vector.broadcast %cst_19 : f32 to vector<1x128xf32>
      %20 = arith.mulf %16, %16 : vector<128x128xf32>
      %cst_20 = arith.constant dense<0.000000e+00> : vector<1x128xf32>
      %21 = tpu.matmul %19, %20, %cst_20 {dimension_numbers = #tpu.dot_dimension_numbers<[1], [1], [0], [0], [0, 0, 1, 0], [], []>} : vector<1x128xf32>, vector<128x128xf32>, vector<1x128xf32> -> vector<1x128xf32>
      %c0_21 = arith.constant 0 : index
      %c0_22 = arith.constant 0 : index
      %22 = vector.load %arg8[%c0_21, %c0_22] : memref<1x128xf32, #tpu.memory_space<vmem>>, vector<1x128xf32>
      tpu.vector_store %arg8[%c0_21, %c0_22], %21 {strides = array<i32>} : memref<1x128xf32, #tpu.memory_space<vmem>>, vector<1x128xf32>,
    } else {
    }
    %c0 = arith.constant 0 : index
    %c0_1 = arith.constant 0 : index
    %3 = vector.load %arg6[%c0, %c0_1] : memref<1x128xf32, #tpu.memory_space<vmem>>, vector<1x128xf32>
    %c0_2 = arith.constant 0 : index
    %c0_3 = arith.constant 0 : index
    %4 = vector.load %arg1[%c0_2, %c0_3] : memref<1x256xbf16, #tpu.memory_space<vmem>>, vector<1x256xbf16>
    %c0_4 = arith.constant 0 : index
    %c0_5 = arith.constant 0 : index
    %5 = vector.load %arg2[%c0_4, %c0_5] : memref<256x128xbf16, #tpu.memory_space<vmem>>, vector<256x128xbf16>
    %cst = arith.constant dense<0.000000e+00> : vector<1x128xf32>
    %6 = tpu.matmul %4, %5, %cst {dimension_numbers = #tpu.dot_dimension_numbers<[1], [0], [0], [1], [0, 0, 1, 1], [], []>} : vector<1x256xbf16>, vector<256x128xbf16>, vector<1x128xf32> -> vector<1x128xf32>
    %7 = arith.addf %3, %6 : vector<1x128xf32>
    %c0_6 = arith.constant 0 : index
    %c0_7 = arith.constant 0 : index
    %8 = vector.load %arg6[%c0_6, %c0_7] : memref<1x128xf32, #tpu.memory_space<vmem>>, vector<1x128xf32>
    tpu.vector_store %arg6[%c0_6, %c0_7], %7 {strides = array<i32>} : memref<1x128xf32, #tpu.memory_space<vmem>>, vector<1x128xf32>,
    %c2_i32 = arith.constant 2 : i32
    %9 = arith.cmpi eq, %arg0, %c2_i32 : i32
    %10 = arith.extui %9 : i1 to i32
    %c0_i32_8 = arith.constant 0 : i32
    %11 = arith.cmpi ne, %10, %c0_i32_8 : i32
    scf.if %11 {
      %c0_9 = arith.constant 0 : index
      %c0_10 = arith.constant 0 : index
      %12 = vector.load %arg6[%c0_9, %c0_10] : memref<1x128xf32, #tpu.memory_space<vmem>>, vector<1x128xf32>
      %13 = arith.truncf %12 : vector<1x128xf32> to vector<1x128xbf16>
      %c0_11 = arith.constant 0 : index
      %c0_12 = arith.constant 0 : index
      %14 = vector.load %arg7[%c0_11, %c0_12] : memref<128x128xbf16, #tpu.memory_space<vmem>>, vector<128x128xbf16>
      %cst_13 = arith.constant dense<0.000000e+00> : vector<1x128xf32>
      %15 = tpu.matmul %13, %14, %cst_13 {dimension_numbers = #tpu.dot_dimension_numbers<[1], [1], [0], [0], [0, 0, 1, 0], [], []>} : vector<1x128xbf16>, vector<128x128xbf16>, vector<1x128xf32> -> vector<1x128xf32>
      %16 = arith.mulf %12, %12 : vector<1x128xf32>
      %cst_14 = arith.constant dense<0.000000e+00> : vector<1xf32>
      %17 = vector.multi_reduction <add>, %16, %cst_14 [1] : vector<1x128xf32> to vector<1xf32>
      %18 = vector.shape_cast %17 : vector<1xf32> to vector<1x1xf32>
      %c0_15 = arith.constant 0 : index
      %c0_16 = arith.constant 0 : index
      %19 = vector.load %arg8[%c0_15, %c0_16] : memref<1x128xf32, #tpu.memory_space<vmem>>, vector<1x128xf32>
      %20 = vector.broadcast %18 : vector<1x1xf32> to vector<1x128xf32>
      %21 = arith.mulf %19, %20 : vector<1x128xf32>
      %cst_17 = arith.constant 1.000000e-16 : f32
      %22 = vector.broadcast %cst_17 : f32 to vector<1x128xf32>
      %23 = arith.maximumf %21, %22 : vector<1x128xf32>
      %24 = math.rsqrt %23 : vector<1x128xf32>
      %25 = arith.mulf %15, %24 : vector<1x128xf32>
      %c0_18 = arith.constant 0 : index
      %c0_19 = arith.constant 0 : index
      %26 = vector.load %arg5[%c0_18, %c0_19] : memref<1x128xf32, #tpu.memory_space<vmem>>, vector<1x128xf32>
      tpu.vector_store %arg5[%c0_18, %c0_19], %25 {strides = array<i32>} : memref<1x128xf32, #tpu.memory_space<vmem>>, vector<1x128xf32>,
    } else {
    }
    return
  }
  func.func @transform_0(%arg0: i32) -> (i32, i32) {
    %c0_i32 = arith.constant 0 : i32
    %c0_i32_0 = arith.constant 0 : i32
    return %c0_i32, %arg0 : i32, i32
  }
  func.func @transform_1(%arg0: i32) -> (i32, i32) {
    %c0_i32 = arith.constant 0 : i32
    %c0_i32_0 = arith.constant 0 : i32
    return %arg0, %c0_i32 : i32, i32
  }
  func.func @transform_2(%arg0: i32) -> (i32, i32) {
    %c0_i32 = arith.constant 0 : i32
    %c0_i32_0 = arith.constant 0 : i32
    %c0_i32_1 = arith.constant 0 : i32
    return %c0_i32, %c0_i32_0 : i32, i32
  }
  func.func @transform_3(%arg0: i32) -> (i32, i32) {
    %c0_i32 = arith.constant 0 : i32
    %c0_i32_0 = arith.constant 0 : i32
    %c0_i32_1 = arith.constant 0 : i32
    return %c0_i32, %c0_i32_0 : i32, i32
  }
  func.func @transform_4(%arg0: i32) -> (i32, i32) {
    %c0_i32 = arith.constant 0 : i32
    %c0_i32_0 = arith.constant 0 : i32
    %c0_i32_1 = arith.constant 0 : i32
    return %c0_i32, %c0_i32_0 : i32, i32
  }
}

</mosaic_0001>

<llo_original>
// kernel: tpu_custom_call.1
$region0: #{tpu_custom_call.1}
  #allocation0 [shape = 'u32[]', space=smem, size = 0x4, offset = 0x4, fixed_abs, tag = 'smem constant byte address 0x4 - core index']
  #allocation1 [shape = 'u32[144,128]{1,0:T(1,128)}', space=vmem, size = 0x12000, scoped, tag = 'internal scratch']
  #allocation2 [shape = 'f32[1,128]{1,0:T(1,128)}', space=vmem, size = 0x200, scoped, tag = 'scratch operand']
  #allocation3 [shape = 'bf16[128,128]{1,0:T(8,128)(2,1)}', space=vmem, size = 0x8000, scoped, tag = 'scratch operand']
  #allocation4 [shape = 'f32[1,128]{1,0:T(1,128)}', space=vmem, size = 0x200, scoped, tag = 'scratch operand']
  %s0 = inlined_call_operand.hbm [shape: bf16[1,768], index: 0, kind: input, shape index: {}]
  %s1 = inlined_call_operand.hbm [shape: bf16[768,128], index: 1, kind: input, shape index: {}]
  %s2 = inlined_call_operand.hbm [shape: bf16[128,128], index: 2, kind: input, shape index: {}]
  %s3 = inlined_call_operand.hbm [shape: bf16[128,128], index: 3, kind: input, shape index: {}]
  %s4 = inlined_call_operand.hbm [shape: f32[1,128], index: 4, kind: output, shape index: {}]
  %s5 = sld [smem:[#allocation0]]
  $region73: #{tpu_custom_call.1} parent=0
    _
  %s7 = ssub.s32 1, %s5
  %s8 = scalar_select 0, %s7, %s5
  $region1: #{tpu_custom_call.1} parent=0
    #allocation5 [shape = 'u8[2048]{0}', space=vmem, size = 0x800, scoped, tag = 'input window, operand 0']
    #allocation6 [shape = 's32[2]{0}', space=sflag, size = 0x8, scoped, tag = 'scoped memory for tpu_custom_call.1']
    #allocation7 [shape = 's32[2]{0}', space=sflag, size = 0x8, scoped, tag = 'scoped memory for tpu_custom_call.1']
    #allocation8 [shape = 'u8[131072]{0}', space=vmem, size = 0x20000, scoped, tag = 'input window, operand 1']
    #allocation9 [shape = 's32[2]{0}', space=sflag, size = 0x8, scoped, tag = 'scoped memory for tpu_custom_call.1']
    #allocation10 [shape = 'u8[32768]{0}', space=vmem, size = 0x8000, scoped, tag = 'input window, operand 2, single buffered']
    #allocation11 [shape = 'u8[32768]{0}', space=vmem, size = 0x8000, scoped, tag = 'input window, operand 3, single buffered']
    #allocation12 [shape = 's32[1]{0}', space=sflag, size = 0x4, scoped, tag = 'scoped memory for tpu_custom_call.1']
    #allocation13 [shape = 'u8[512]{0}', space=vmem, size = 0x400, scoped, tag = 'output window, operand 0, single buffered']
    %9 = vsyncpa [#allocation6], 0
    %s10 = scalar_lea.sflag [#allocation6], 1
    %11 = vsyncpa %s10, 0
    %12 = vsyncpa [#allocation9], 0
    %s13 = scalar_lea.sflag [#allocation9], 1
    %14 = vsyncpa %s13, 0
    %15 = vsyncpa [#allocation12], 0
    %16 = vsyncpa [#allocation7], 0
    loop: start=0, step=1, limit=5
    $region2: #{tpu_custom_call.1} parent=1 // loop_pre_header
      _
    $region3: #{tpu_custom_call.1} parent=1 // loop_header
      %s18 = sphi 0, %s22
      %p19 = scmp.ge.s32.totalorder %s18, 5
      %s28 = sphi 0, %s30
      %s31 = sphi 0, %s28
      %s32 = sphi 0, %s31
      %s48 = sphi 0, %s32
      %s54 = sphi 0, %s56
      %s57 = sphi 0, %s54
      %s58 = sphi 0, %s57
      %s74 = sphi 0, %s58
      %s78 = sphi 0, %s78
      %s80 = sphi 0, %s78
      %s81 = sphi 0, %s80
      %s95 = sphi 0, %s81
      %s99 = sphi 0, %s99
      %s101 = sphi 0, %s99
      %s102 = sphi 0, %s101
      %s116 = sphi 0, %s102
      %s120 = sphi 0, %s120
      %s122 = sphi 0, %s120
      %s123 = sphi 0, %s122
      %s137 = sphi 0, %s123
    $region4: #{tpu_custom_call.1} parent=1 // loop_header_branch
      %21 = sbr.rel (%p19) target = $region8
    $region5: #{tpu_custom_call.1} parent=1 // loop_body
      %s23 = ssub.s32 %s18, 1
      %s24 = ssub.s32 %s18, 2
      %s25 = sadd.s32 %s18, 1
      %s26 = ssub.s32 %s18, %s25
      %p27 = scmp.eq.s32.totalorder %s26, 0
      %s29 = sadd.s32 %s28, 1
      %s30 = scalar_select %p27, %s28, %s29
      %p33 = pneg %p27
      %p34 = scmp.eq.s32.totalorder %s18, 2
      %p35 = por %p33, %p34
      %p36 = scmp.ne.s32.totalorder %s28, %s31
      %p37 = scmp.eq.s32.totalorder %s18, 0
      %p38 = por %p36, %p37
      %p39 = scmp.ne.s32.totalorder %s28, %s31
      %p40 = scmp.eq.s32.totalorder %s23, 2
      %p41 = por %p39, %p40
      %p42 = scmp.ne.s32.totalorder %s31, %s32
      %p43 = scmp.eq.s32.totalorder %s23, 0
      %p44 = por %p42, %p43
      %p45 = scmp.ne.s32.totalorder %s31, %s32
      %p46 = scmp.eq.s32.totalorder %s24, 2
      %p47 = por %p45, %p46
      %p49 = scmp.ne.s32.totalorder %s32, %s48
      %p50 = scmp.eq.s32.totalorder %s24, 0
      %p51 = por %p49, %p50
      %s52 = ssub.s32 %s18, %s25
      %p53 = scmp.eq.s32.totalorder %s52, 0
      %s55 = sadd.s32 %s54, 1
      %s56 = scalar_select %p53, %s54, %s55
      %p59 = pneg %p53
      %p60 = scmp.eq.s32.totalorder %s18, 2
      %p61 = por %p59, %p60
      %p62 = scmp.ne.s32.totalorder %s54, %s57
      %p63 = scmp.eq.s32.totalorder %s18, 0
      %p64 = por %p62, %p63
      %p65 = scmp.ne.s32.totalorder %s54, %s57
      %p66 = scmp.eq.s32.totalorder %s23, 2
      %p67 = por %p65, %p66
      %p68 = scmp.ne.s32.totalorder %s57, %s58
      %p69 = scmp.eq.s32.totalorder %s23, 0
      %p70 = por %p68, %p69
      %p71 = scmp.ne.s32.totalorder %s57, %s58
      %p72 = scmp.eq.s32.totalorder %s24, 2
      %p73 = por %p71, %p72
      %p75 = scmp.ne.s32.totalorder %s58, %s74
      %p76 = scmp.eq.s32.totalorder %s24, 0
      %p77 = por %p75, %p76
      %s79 = sadd.s32 %s78, 1
      %p82 = scmp.eq.s32.totalorder %s18, 2
      %p83 = scmp.ne.s32.totalorder %s78, %s80
      %p84 = scmp.eq.s32.totalorder %s18, 0
      %p85 = por %p83, %p84
      %p86 = scmp.ne.s32.totalorder %s78, %s80
      %p87 = scmp.eq.s32.totalorder %s23, 2
      %p88 = por %p86, %p87
      %p89 = scmp.ne.s32.totalorder %s80, %s81
      %p90 = scmp.eq.s32.totalorder %s23, 0
      %p91 = por %p89, %p90
      %p92 = scmp.ne.s32.totalorder %s80, %s81
      %p93 = scmp.eq.s32.totalorder %s24, 2
      %p94 = por %p92, %p93
      %p96 = scmp.ne.s32.totalorder %s81, %s95
      %p97 = scmp.eq.s32.totalorder %s24, 0
      %p98 = por %p96, %p97
      %s100 = sadd.s32 %s99, 1
      %p103 = scmp.eq.s32.totalorder %s18, 2
      %p104 = scmp.ne.s32.totalorder %s99, %s101
      %p105 = scmp.eq.s32.totalorder %s18, 0
      %p106 = por %p104, %p105
      %p107 = scmp.ne.s32.totalorder %s99, %s101
      %p108 = scmp.eq.s32.totalorder %s23, 2
      %p109 = por %p107, %p108
      %p110 = scmp.ne.s32.totalorder %s101, %s102
      %p111 = scmp.eq.s32.totalorder %s23, 0
      %p112 = por %p110, %p111
      %p113 = scmp.ne.s32.totalorder %s101, %s102
      %p114 = scmp.eq.s32.totalorder %s24, 2
      %p115 = por %p113, %p114
      %p117 = scmp.ne.s32.totalorder %s102, %s116
      %p118 = scmp.eq.s32.totalorder %s24, 0
      %p119 = por %p117, %p118
      %s121 = sadd.s32 %s120, 1
      %p124 = scmp.eq.s32.totalorder %s18, 2
      %p125 = scmp.ne.s32.totalorder %s120, %s122
      %p126 = scmp.eq.s32.totalorder %s18, 0
      %p127 = por %p125, %p126
      %p128 = scmp.ne.s32.totalorder %s120, %s122
      %p129 = scmp.eq.s32.totalorder %s23, 2
      %p130 = por %p128, %p129
      %p131 = scmp.ne.s32.totalorder %s122, %s123
      %p132 = scmp.eq.s32.totalorder %s23, 0
      %p133 = por %p131, %p132
      %p134 = scmp.ne.s32.totalorder %s122, %s123
      %p135 = scmp.eq.s32.totalorder %s24, 2
      %p136 = por %p134, %p135
      %p138 = scmp.ne.s32.totalorder %s123, %s137
      %p139 = scmp.eq.s32.totalorder %s24, 0
      %p140 = por %p138, %p139
      %p141 = scmp.le.s32.totalorder 1, %s18
      %p142 = scmp.lt.s32.totalorder %s18, 4
      %p143 = pnand %p141, %p142
      %p144 = pneg %p143
      // Predicated region
      $region9: #{tpu_custom_call.1} parent=5 // pred_check
        _
      $region10: #{tpu_custom_call.1} parent=5 // pred_check_branch
        %146 = sbr.rel (%p143) target = $region12
      $region11: #{tpu_custom_call.1} parent=5 // pred_region
        %s147 = ssub.s32 %s18, 1
        // Predicated region
        $region13: #{tpu_custom_call.1} parent=11 // pred_check
          %p148 = pneg %p91
        $region14: #{tpu_custom_call.1} parent=11 // pred_check_branch
          %150 = sbr.rel (%p148) target = $region16
        $region15: #{tpu_custom_call.1} parent=11 // pred_region
          %s152 = ssub.s32 1024, 1024
          %153 = vsyncadd [#allocation9], %s152
          %s154 = sshll.u32 [#allocation10], 4
          %s155 = int_to_ptr.vmem [resolvable:$true] %s154
          %160 = dma.hbm_to_vmem [thread:$0]  %s2, 1024, %s155, [#allocation9], 64, 64, 4
        $region16: #{tpu_custom_call.1} parent=11 // pred_fallthru
          _
        // Predicated region
        $region17: #{tpu_custom_call.1} parent=11 // pred_check
          %p161 = pneg %p112
        $region18: #{tpu_custom_call.1} parent=11 // pred_check_branch
          %163 = sbr.rel (%p161) target = $region20
        $region19: #{tpu_custom_call.1} parent=11 // pred_region
          %s165 = ssub.s32 1024, 1024
          %166 = vsyncadd [#allocation12], %s165
          %s167 = sshll.u32 [#allocation11], 4
          %s168 = int_to_ptr.vmem [resolvable:$true] %s167
          %173 = dma.hbm_to_vmem [thread:$0]  %s3, 1024, %s168, [#allocation12], 64, 64, 4
        $region20: #{tpu_custom_call.1} parent=11 // pred_fallthru
          _
      $region12: #{tpu_custom_call.1} parent=5 // pred_fallthru
        _
      %p174 = scmp.lt.s32.totalorder %s18, 3
      // Predicated region
      $region21: #{tpu_custom_call.1} parent=5 // pred_check
        %p175 = pneg %p174
      $region22: #{tpu_custom_call.1} parent=5 // pred_check_branch
        %177 = sbr.rel (%p175) target = $region24
      $region23: #{tpu_custom_call.1} parent=5 // pred_region
        // Predicated region
        $region25: #{tpu_custom_call.1} parent=23 // pred_check
          %p178 = pneg %p38
        $region26: #{tpu_custom_call.1} parent=23 // pred_check_branch
          %180 = sbr.rel (%p178) target = $region28
        $region27: #{tpu_custom_call.1} parent=23 // pred_region
          %s181 = sand.u32 %s28, 1
          %s182 = scalar_lea.sflag [#allocation6], %s181
          %s183 = sand.u32 %s28, 1
          %s184 = smul.addr %s183, 2
          %s185 = scalar_lea.vmem [#allocation5], %s184
          %s186 = smul.u32 2, %s18
          %s188 = ssub.s32 32, 32
          %189 = vsyncadd %s182, %s188
          %s190 = smul.addr %s186, 16
          %s191 = scalar_lea.hbm %s0, %s190
          %s193 = sshll.u32 %s185, 4
          %s194 = int_to_ptr.vmem [resolvable:$true] %s193
          %196 = dma.hbm_to_vmem [thread:$0]  %s191, 32, %s194, %s182
        $region28: #{tpu_custom_call.1} parent=23 // pred_fallthru
          _
        // Predicated region
        $region29: #{tpu_custom_call.1} parent=23 // pred_check
          %p197 = pneg %p64
        $region30: #{tpu_custom_call.1} parent=23 // pred_check_branch
          %199 = sbr.rel (%p197) target = $region32
        $region31: #{tpu_custom_call.1} parent=23 // pred_region
          %s200 = sand.u32 %s18, 1
          %s201 = scalar_lea.sflag [#allocation9], %s200
          %s202 = sand.u32 %s54, 1
          %s203 = smul.addr %s202, 128
          %s204 = scalar_lea.vmem [#allocation8], %s203
          %s205 = smul.u32 32, %s18
          %s207 = ssub.s32 2048, 2048
          %208 = vsyncadd %s201, %s207
          %s209 = smul.addr %s205, 64
          %s210 = scalar_lea.hbm %s1, %s209
          %s211 = sshll.u32 %s204, 4
          %s212 = int_to_ptr.vmem [resolvable:$true] %s211
          %217 = dma.hbm_to_vmem [thread:$0]  %s210, 2048, %s212, %s201, 64, 64, 4
        $region32: #{tpu_custom_call.1} parent=23 // pred_fallthru
          _
      $region24: #{tpu_custom_call.1} parent=5 // pred_fallthru
        _
      %p218 = scmp.le.s32.totalorder 1, %s18
      %p219 = scmp.lt.s32.totalorder %s18, 4
      %p220 = pnand %p218, %p219
      %p221 = pneg %p220
      // Predicated region
      $region33: #{tpu_custom_call.1} parent=5 // pred_check
        _
      $region34: #{tpu_custom_call.1} parent=5 // pred_check_branch
        %223 = sbr.rel (%p220) target = $region36
      $region35: #{tpu_custom_call.1} parent=5 // pred_region
        %s224 = ssub.s32 %s18, 1
        %s225 = sand.u32 %s31, 1
        %s226 = scalar_lea.sflag [#allocation6], %s225
        %s227 = sand.u32 %s31, 1
        %s228 = smul.addr %s227, 2
        %s229 = scalar_lea.vmem [#allocation5], %s228
        // Predicated region
        $region37: #{tpu_custom_call.1} parent=35 // pred_check
          %p230 = pneg %p44
        $region38: #{tpu_custom_call.1} parent=35 // pred_check_branch
          %232 = sbr.rel (%p230) target = $region40
        $region39: #{tpu_custom_call.1} parent=35 // pred_region
          %233 = dma.done %s226, 32
        $region40: #{tpu_custom_call.1} parent=35 // pred_fallthru
          _
        %s234 = sand.u32 %s23, 1
        %s235 = scalar_lea.sflag [#allocation9], %s234
        %s236 = sand.u32 %s57, 1
        %s237 = smul.addr %s236, 128
        %s238 = scalar_lea.vmem [#allocation8], %s237
        // Predicated region
        $region41: #{tpu_custom_call.1} parent=35 // pred_check
          %p239 = pneg %p70
        $region42: #{tpu_custom_call.1} parent=35 // pred_check_branch
          %241 = sbr.rel (%p239) target = $region44
        $region43: #{tpu_custom_call.1} parent=35 // pred_region
          %242 = dma.done %s235, 2048
        $region44: #{tpu_custom_call.1} parent=35 // pred_fallthru
          _
        // Predicated region
        $region45: #{tpu_custom_call.1} parent=35 // pred_check
          %p243 = pneg %p91
        $region46: #{tpu_custom_call.1} parent=35 // pred_check_branch
          %245 = sbr.rel (%p243) target = $region48
        $region47: #{tpu_custom_call.1} parent=35 // pred_region
          %246 = dma.done [#allocation9], 1024
        $region48: #{tpu_custom_call.1} parent=35 // pred_fallthru
          _
        // Predicated region
        $region49: #{tpu_custom_call.1} parent=35 // pred_check
          %p247 = pneg %p112
        $region50: #{tpu_custom_call.1} parent=35 // pred_check_branch
          %249 = sbr.rel (%p247) target = $region52
        $region51: #{tpu_custom_call.1} parent=35 // pred_region
          %250 = dma.done [#allocation12], 1024
        $region52: #{tpu_custom_call.1} parent=35 // pred_fallthru
          _
        %s251 = sand.u32 %s31, 1
        %s252 = scalar_lea.sflag [#allocation6], %s251
        %s253 = sand.u32 %s31, 1
        %s254 = smul.addr %s253, 2
        %s255 = scalar_lea.vmem [#allocation5], %s254
        %p256 = pneg %p44
        %p257 = pneg %p41
        %s258 = sand.u32 %s23, 1
        %s259 = scalar_lea.sflag [#allocation9], %s258
        %s260 = sand.u32 %s57, 1
        %s261 = smul.addr %s260, 128
        %s262 = scalar_lea.vmem [#allocation8], %s261
        %p263 = pneg %p70
        %p264 = pneg %p67
        %p265 = pneg %p91
        %p266 = pneg %p88
        %p267 = pneg %p112
        %p268 = pneg %p109
        %p269 = pneg %p133
        %p270 = pneg %p130
        %s271 = smul.u32 2, %s23
        %s272 = smul.u32 32, %s23
        %p274 = scmp.eq.s32.totalorder %s23, 0
        // Predicated region
        $region53: #{tpu_custom_call.1} parent=35 // pred_check
          %p275 = pneg %p274
        $region54: #{tpu_custom_call.1} parent=35 // pred_check_branch
          %277 = sbr.rel (%p275) target = $region56
        $region55: #{tpu_custom_call.1} parent=35 // pred_region
          %278 = vst [vmem:[#allocation2] sm:$0x1] 0.0
          %v279 = vld [vmem:[#allocation10] sm:$0xf]
          %v280 = vld [vmem:[#allocation10 + $0x4] sm:$0xf]
          %v281 = vld [vmem:[#allocation10 + $0x8] sm:$0xf]
          %v282 = vld [vmem:[#allocation10 + $0xc] sm:$0xf]
          %v283 = vld [vmem:[#allocation10 + $0x10] sm:$0xf]
          %v284 = vld [vmem:[#allocation10 + $0x14] sm:$0xf]
          %v285 = vld [vmem:[#allocation10 + $0x18] sm:$0xf]
          %v286 = vld [vmem:[#allocation10 + $0x1c] sm:$0xf]
          %v287 = vld [vmem:[#allocation10 + $0x20] sm:$0xf]
          %v288 = vld [vmem:[#allocation10 + $0x24] sm:$0xf]
          %v289 = vld [vmem:[#allocation10 + $0x28] sm:$0xf]
          %v290 = vld [vmem:[#allocation10 + $0x2c] sm:$0xf]
          %v291 = vld [vmem:[#allocation10 + $0x30] sm:$0xf]
          %v292 = vld [vmem:[#allocation10 + $0x34] sm:$0xf]
          %v293 = vld [vmem:[#allocation10 + $0x38] sm:$0xf]
          %v294 = vld [vmem:[#allocation10 + $0x3c] sm:$0xf]
          %v295 = vld [vmem:[#allocation11] sm:$0xf]
          %v296 = vld [vmem:[#allocation11 + $0x4] sm:$0xf]
          %v297 = vld [vmem:[#allocation11 + $0x8] sm:$0xf]
          %v298 = vld [vmem:[#allocation11 + $0xc] sm:$0xf]
          %v299 = vld [vmem:[#allocation11 + $0x10] sm:$0xf]
          %v300 = vld [vmem:[#allocation11 + $0x14] sm:$0xf]
          %v301 = vld [vmem:[#allocation11 + $0x18] sm:$0xf]
          %v302 = vld [vmem:[#allocation11 + $0x1c] sm:$0xf]
          %v303 = vld [vmem:[#allocation11 + $0x20] sm:$0xf]
          %v304 = vld [vmem:[#allocation11 + $0x24] sm:$0xf]
          %v305 = vld [vmem:[#allocation11 + $0x28] sm:$0xf]
          %v306 = vld [vmem:[#allocation11 + $0x2c] sm:$0xf]
          %v307 = vld [vmem:[#allocation11 + $0x30] sm:$0xf]
          %v308 = vld [vmem:[#allocation11 + $0x34] sm:$0xf]
          %v309 = vld [vmem:[#allocation11 + $0x38] sm:$0xf]
          %v310 = vld [vmem:[#allocation11 + $0x3c] sm:$0xf]
          %v327 = vunpack.c.l.b16 %v279
          %v328 = vunpack.c.l.b16 %v280
          %v329 = vunpack.c.l.b16 %v281
          %v330 = vunpack.c.l.b16 %v282
          %v331 = vunpack.c.l.b16 %v283
          %v332 = vunpack.c.l.b16 %v284
          %v333 = vunpack.c.l.b16 %v285
          %v334 = vunpack.c.l.b16 %v286
          %v335 = vunpack.c.l.b16 %v287
          %v336 = vunpack.c.l.b16 %v288
          %v337 = vunpack.c.l.b16 %v289
          %v338 = vunpack.c.l.b16 %v290
          %v339 = vunpack.c.l.b16 %v291
          %v340 = vunpack.c.l.b16 %v292
          %v341 = vunpack.c.l.b16 %v293
          %v342 = vunpack.c.l.b16 %v294
          %v343 = vpack.c.b16 %v328, %v327
          %v344 = vpack.c.b16 %v330, %v329
          %v345 = vpack.c.b16 %v332, %v331
          %v346 = vpack.c.b16 %v334, %v333
          %v347 = vpack.c.b16 %v336, %v335
          %v348 = vpack.c.b16 %v338, %v337
          %v349 = vpack.c.b16 %v340, %v339
          %v350 = vpack.c.b16 %v342, %v341
          %v375 = vunpack.c.l.b16 %v295
          %v376 = vunpack.c.l.b16 %v296
          %v377 = vunpack.c.l.b16 %v297
          %v378 = vunpack.c.l.b16 %v298
          %v379 = vunpack.c.l.b16 %v299
          %v380 = vunpack.c.l.b16 %v300
          %v381 = vunpack.c.l.b16 %v301
          %v382 = vunpack.c.l.b16 %v302
          %v383 = vunpack.c.l.b16 %v303
          %v384 = vunpack.c.l.b16 %v304
          %v385 = vunpack.c.l.b16 %v305
          %v386 = vunpack.c.l.b16 %v306
          %v387 = vunpack.c.l.b16 %v307
          %v388 = vunpack.c.l.b16 %v308
          %v389 = vunpack.c.l.b16 %v309
          %v390 = vunpack.c.l.b16 %v310
          %v391 = vpack.c.b16 %v376, %v375
          %v392 = vpack.c.b16 %v378, %v377
          %v393 = vpack.c.b16 %v380, %v379
          %v394 = vpack.c.b16 %v382, %v381
          %v395 = vpack.c.b16 %v384, %v383
          %v396 = vpack.c.b16 %v386, %v385
          %v397 = vpack.c.b16 %v388, %v387
          %v398 = vpack.c.b16 %v390, %v389
          %407 = vmatprep.subr.bf16.mxu0 0
          %408 = vmatpush1.bf16.msra.mxu0 %v398
          %409 = vmatprep.subr.bf16.mxu0 0
          %410 = vmatpush1.bf16.msra.mxu0 %v397
          %411 = vmatprep.subr.bf16.mxu0 0
          %412 = vmatpush1.bf16.msra.mxu0 %v396
          %413 = vmatprep.subr.bf16.mxu0 0
          %414 = vmatpush1.bf16.msra.mxu0 %v395
          %415 = vmatprep.subr.bf16.mxu0 0
          %416 = vmatpush1.bf16.msra.mxu0 %v394
          %417 = vmatprep.subr.bf16.mxu0 0
          %418 = vmatpush1.bf16.msra.mxu0 %v393
          %419 = vmatprep.subr.bf16.mxu0 0
          %420 = vmatpush1.bf16.msra.mxu0 %v392
          %421 = vmatprep.subr.bf16.mxu0 0
          %422 = vmatpush1.bf16.msra.mxu0 %v391
          %423 = vmatprep.subr.bf16.mxu0 0
          %424 = vmatpush2.bf16.msra.mxu0 0
          %425 = vmatprep.subr.bf16.mxu0 0
          %426 = vmatpush2.bf16.msra.mxu0 0
          %427 = vmatprep.subr.bf16.mxu0 0
          %428 = vmatpush2.bf16.msra.mxu0 0
          %429 = vmatprep.subr.bf16.mxu0 0
          %430 = vmatpush2.bf16.msra.mxu0 0
          %431 = vmatprep.subr.bf16.mxu0 0
          %432 = vmatpush2.bf16.msra.mxu0 0
          %433 = vmatprep.subr.bf16.mxu0 0
          %434 = vmatpush2.bf16.msra.mxu0 0
          %435 = vmatprep.subr.bf16.mxu0 0
          %436 = vmatpush2.bf16.msra.mxu0 0
          %437 = vmatprep.subr.bf16.mxu0 0
          %438 = vmatpush2.bf16.msra.mxu0 0
          %439 = vmatprep.mubr.bf16.mxu0 0
          %440 = vmatmul.mubr.bf16.gmra.mxu0 %v343
          %v441 = vpop.f32.mrf.mxu0
          %v442 = vadd.f32 0.0, %v441
          %v443 = vpop.f32.mrf.mxu0
          %v444 = vpop.f32.mrf.mxu0
          %v445 = vadd.f32 0.0, %v444
          %v446 = vpop.f32.mrf.mxu0
          %447 = vmatprep.mubr.bf16.mxu0 0
          %448 = vmatmul.mubr.bf16.gmra.mxu0 %v344
          %v449 = vpop.f32.mrf.mxu0
          %v450 = vadd.f32 0.0, %v449
          %v451 = vpop.f32.mrf.mxu0
          %v452 = vpop.f32.mrf.mxu0
          %v453 = vadd.f32 0.0, %v452
          %v454 = vpop.f32.mrf.mxu0
          %455 = vmatprep.mubr.bf16.mxu0 0
          %456 = vmatmul.mubr.bf16.gmra.mxu0 %v345
          %v457 = vpop.f32.mrf.mxu0
          %v458 = vadd.f32 0.0, %v457
          %v459 = vpop.f32.mrf.mxu0
          %v460 = vpop.f32.mrf.mxu0
          %v461 = vadd.f32 0.0, %v460
          %v462 = vpop.f32.mrf.mxu0
          %463 = vmatprep.mubr.bf16.mxu0 0
          %464 = vmatmul.mubr.bf16.gmra.mxu0 %v346
          %v465 = vpop.f32.mrf.mxu0
          %v466 = vadd.f32 0.0, %v465
          %v467 = vpop.f32.mrf.mxu0
          %v468 = vpop.f32.mrf.mxu0
          %v469 = vadd.f32 0.0, %v468
          %v470 = vpop.f32.mrf.mxu0
          %471 = vmatprep.mubr.bf16.mxu0 0
          %472 = vmatmul.mubr.bf16.gmra.mxu0 %v347
          %v473 = vpop.f32.mrf.mxu0
          %v474 = vadd.f32 0.0, %v473
          %v475 = vpop.f32.mrf.mxu0
          %v476 = vpop.f32.mrf.mxu0
          %v477 = vadd.f32 0.0, %v476
          %v478 = vpop.f32.mrf.mxu0
          %479 = vmatprep.mubr.bf16.mxu0 0
          %480 = vmatmul.mubr.bf16.gmra.mxu0 %v348
          %v481 = vpop.f32.mrf.mxu0
          %v482 = vadd.f32 0.0, %v481
          %v483 = vpop.f32.mrf.mxu0
          %v484 = vpop.f32.mrf.mxu0
          %v485 = vadd.f32 0.0, %v484
          %v486 = vpop.f32.mrf.mxu0
          %487 = vmatprep.mubr.bf16.mxu0 0
          %488 = vmatmul.mubr.bf16.gmra.mxu0 %v349
          %v489 = vpop.f32.mrf.mxu0
          %v490 = vadd.f32 0.0, %v489
          %v491 = vpop.f32.mrf.mxu0
          %v492 = vpop.f32.mrf.mxu0
          %v493 = vadd.f32 0.0, %v492
          %v494 = vpop.f32.mrf.mxu0
          %495 = vmatprep.mubr.bf16.mxu0 0
          %496 = vmatmul.mubr.bf16.gmra.mxu0 %v350
          %v497 = vpop.f32.mrf.mxu0
          %v498 = vadd.f32 0.0, %v497
          %v499 = vpop.f32.mrf.mxu0
          %v500 = vpop.f32.mrf.mxu0
          %v501 = vadd.f32 0.0, %v500
          %v502 = vpop.f32.mrf.mxu0
          %503 = vdwg.mxu0
          %v504 = vpack.c.bf16 %v445, %v442
          %v505 = vpack.c.bf16 %v453, %v450
          %v506 = vpack.c.bf16 %v461, %v458
          %v507 = vpack.c.bf16 %v469, %v466
          %v508 = vpack.c.bf16 %v477, %v474
          %v509 = vpack.c.bf16 %v485, %v482
          %v510 = vpack.c.bf16 %v493, %v490
          %v511 = vpack.c.bf16 %v501, %v498
          %v520 = vunpack.c.l.b16 %v504
          %v521 = vunpack.c.h.b16 %v504
          %v522 = vunpack.c.l.b16 %v505
          %v523 = vunpack.c.h.b16 %v505
          %v524 = vunpack.c.l.b16 %v506
          %v525 = vunpack.c.h.b16 %v506
          %v526 = vunpack.c.l.b16 %v507
          %v527 = vunpack.c.h.b16 %v507
          %v528 = vunpack.c.l.b16 %v508
          %v529 = vunpack.c.h.b16 %v508
          %v530 = vunpack.c.l.b16 %v509
          %v531 = vunpack.c.h.b16 %v509
          %v532 = vunpack.c.l.b16 %v510
          %v533 = vunpack.c.h.b16 %v510
          %v534 = vunpack.c.l.b16 %v511
          %v535 = vunpack.c.h.b16 %v511
          %v536 = vpack.c.b16 %v520, %v520
          %v537 = vpack.c.b16 %v521, %v521
          %v538 = vpack.c.b16 %v522, %v522
          %v539 = vpack.c.b16 %v523, %v523
          %v540 = vpack.c.b16 %v524, %v524
          %v541 = vpack.c.b16 %v525, %v525
          %v542 = vpack.c.b16 %v526, %v526
          %v543 = vpack.c.b16 %v527, %v527
          %v544 = vpack.c.b16 %v528, %v528
          %v545 = vpack.c.b16 %v529, %v529
          %v546 = vpack.c.b16 %v530, %v530
          %v547 = vpack.c.b16 %v531, %v531
          %v548 = vpack.c.b16 %v532, %v532
          %v549 = vpack.c.b16 %v533, %v533
          %v550 = vpack.c.b16 %v534, %v534
          %v551 = vpack.c.b16 %v535, %v535
          %568 = vst [vmem:[#allocation3] sm:$0xf] %v536
          %569 = vst [vmem:[#allocation3 + $0x4] sm:$0xf] %v537
          %570 = vst [vmem:[#allocation3 + $0x8] sm:$0xf] %v538
          %571 = vst [vmem:[#allocation3 + $0xc] sm:$0xf] %v539
          %572 = vst [vmem:[#allocation3 + $0x10] sm:$0xf] %v540
          %573 = vst [vmem:[#allocation3 + $0x14] sm:$0xf] %v541
          %574 = vst [vmem:[#allocation3 + $0x18] sm:$0xf] %v542
          %575 = vst [vmem:[#allocation3 + $0x1c] sm:$0xf] %v543
          %576 = vst [vmem:[#allocation3 + $0x20] sm:$0xf] %v544
          %577 = vst [vmem:[#allocation3 + $0x24] sm:$0xf] %v545
          %578 = vst [vmem:[#allocation3 + $0x28] sm:$0xf] %v546
          %579 = vst [vmem:[#allocation3 + $0x2c] sm:$0xf] %v547
          %580 = vst [vmem:[#allocation3 + $0x30] sm:$0xf] %v548
          %581 = vst [vmem:[#allocation3 + $0x34] sm:$0xf] %v549
          %582 = vst [vmem:[#allocation3 + $0x38] sm:$0xf] %v550
          %583 = vst [vmem:[#allocation3 + $0x3c] sm:$0xf] %v551
          %v584 = vmul.f32 %v442, %v442
          %v585 = vmul.f32 %v445, %v445
          %v586 = vmul.f32 %v450, %v450
          %v587 = vmul.f32 %v453, %v453
          %v588 = vmul.f32 %v458, %v458
          %v589 = vmul.f32 %v461, %v461
          %v590 = vmul.f32 %v466, %v466
          %v591 = vmul.f32 %v469, %v469
          %v592 = vmul.f32 %v474, %v474
          %v593 = vmul.f32 %v477, %v477
          %v594 = vmul.f32 %v482, %v482
          %v595 = vmul.f32 %v485, %v485
          %v596 = vmul.f32 %v490, %v490
          %v597 = vmul.f32 %v493, %v493
          %v598 = vmul.f32 %v498, %v498
          %v599 = vmul.f32 %v501, %v501
          %600 = vmatprep.subr.mxu0 0.0
          %601 = vmatpush1.xpose.msra.mxu0 %v599
          %602 = vmatprep.subr.mxu0 0.0
          %603 = vmatpush1.xpose.msra.mxu0 %v598
          %604 = vmatprep.subr.mxu0 0.0
          %605 = vmatpush1.xpose.msra.mxu0 %v597
          %606 = vmatprep.subr.mxu0 0.0
          %607 = vmatpush1.xpose.msra.mxu0 %v596
          %608 = vmatprep.subr.mxu0 0.0
          %609 = vmatpush1.xpose.msra.mxu0 %v595
          %610 = vmatprep.subr.mxu0 0.0
          %611 = vmatpush1.xpose.msra.mxu0 %v594
          %612 = vmatprep.subr.mxu0 0.0
          %613 = vmatpush1.xpose.msra.mxu0 %v593
          %614 = vmatprep.subr.mxu0 0.0
          %615 = vmatpush1.xpose.msra.mxu0 %v592
          %616 = vmatprep.subr.mxu0 0.0
          %617 = vmatpush1.xpose.msra.mxu0 %v591
          %618 = vmatprep.subr.mxu0 0.0
          %619 = vmatpush1.xpose.msra.mxu0 %v590
          %620 = vmatprep.subr.mxu0 0.0
          %621 = vmatpush1.xpose.msra.mxu0 %v589
          %622 = vmatprep.subr.mxu0 0.0
          %623 = vmatpush1.xpose.msra.mxu0 %v588
          %624 = vmatprep.subr.mxu0 0.0
          %625 = vmatpush1.xpose.msra.mxu0 %v587
          %626 = vmatprep.subr.mxu0 0.0
          %627 = vmatpush1.xpose.msra.mxu0 %v586
          %628 = vmatprep.subr.mxu0 0.0
          %629 = vmatpush1.xpose.msra.mxu0 %v585
          %630 = vmatprep.subr.mxu0 0.0
          %631 = vmatpush1.xpose.msra.mxu0 %v584
          %632 = vmatprep.subr.mxu0 0.0
          %633 = vmatpush2.xpose.msra.mxu0 0.0
          %634 = vmatprep.subr.mxu0 0.0
          %635 = vmatpush2.xpose.msra.mxu0 0.0
          %636 = vmatprep.subr.mxu0 0.0
          %637 = vmatpush2.xpose.msra.mxu0 0.0
          %638 = vmatprep.subr.mxu0 0.0
          %639 = vmatpush2.xpose.msra.mxu0 0.0
          %640 = vmatprep.subr.mxu0 0.0
          %641 = vmatpush2.xpose.msra.mxu0 0.0
          %642 = vmatprep.subr.mxu0 0.0
          %643 = vmatpush2.xpose.msra.mxu0 0.0
          %644 = vmatprep.subr.mxu0 0.0
          %645 = vmatpush2.xpose.msra.mxu0 0.0
          %646 = vmatprep.subr.mxu0 0.0
          %647 = vmatpush2.xpose.msra.mxu0 0.0
          %648 = vmatprep.subr.mxu0 0.0
          %649 = vmatpush2.xpose.msra.mxu0 0.0
          %650 = vmatprep.subr.mxu0 0.0
          %651 = vmatpush2.xpose.msra.mxu0 0.0
          %652 = vmatprep.subr.mxu0 0.0
          %653 = vmatpush2.xpose.msra.mxu0 0.0
          %654 = vmatprep.subr.mxu0 0.0
          %655 = vmatpush2.xpose.msra.mxu0 0.0
          %656 = vmatprep.subr.mxu0 0.0
          %657 = vmatpush2.xpose.msra.mxu0 0.0
          %658 = vmatprep.subr.mxu0 0.0
          %659 = vmatpush2.xpose.msra.mxu0 0.0
          %660 = vmatprep.subr.mxu0 0.0
          %661 = vmatpush2.xpose.msra.mxu0 0.0
          %662 = vmatprep.subr.mxu0 0.0
          %663 = vmatpush2.xpose.msra.mxu0 0.0
          %664 = vmatprep.mubr.f32.mxu0 0.0
          %665 = vmatmul.mubr.f32.gmra.mxu0 1.0
          %v666 = vpop.f32.mrf.mxu0
          %v667 = vadd.f32 0.0, %v666
          %v668 = vpop.f32.mrf.mxu0
          %669 = vdwg.mxu0
          %670 = vst [vmem:[#allocation4] sm:$0x1] %v667
        $region56: #{tpu_custom_call.1} parent=35 // pred_fallthru
          _
        %v671 = vld [vmem:[#allocation2] sm:$0x1]
        %v672 = vld [vmem:[%s229] sm:$0x3]
        %v673 = vld [vmem:[%s238] sm:$0xf]
        %v674 = vld [vmem:[%s238 + $0x4] sm:$0xf]
        %v675 = vld [vmem:[%s238 + $0x8] sm:$0xf]
        %v676 = vld [vmem:[%s238 + $0xc] sm:$0xf]
        %v677 = vld [vmem:[%s238 + $0x10] sm:$0xf]
        %v678 = vld [vmem:[%s238 + $0x14] sm:$0xf]
        %v679 = vld [vmem:[%s238 + $0x18] sm:$0xf]
        %v680 = vld [vmem:[%s238 + $0x1c] sm:$0xf]
        %v681 = vld [vmem:[%s238 + $0x20] sm:$0xf]
        %v682 = vld [vmem:[%s238 + $0x24] sm:$0xf]
        %v683 = vld [vmem:[%s238 + $0x28] sm:$0xf]
        %v684 = vld [vmem:[%s238 + $0x2c] sm:$0xf]
        %v685 = vld [vmem:[%s238 + $0x30] sm:$0xf]
        %v686 = vld [vmem:[%s238 + $0x34] sm:$0xf]
        %v687 = vld [vmem:[%s238 + $0x38] sm:$0xf]
        %v688 = vld [vmem:[%s238 + $0x3c] sm:$0xf]
        %v689 = vld [vmem:[%s238 + $0x40] sm:$0xf]
        %v690 = vld [vmem:[%s238 + $0x44] sm:$0xf]
        %v691 = vld [vmem:[%s238 + $0x48] sm:$0xf]
        %v692 = vld [vmem:[%s238 + $0x4c] sm:$0xf]
        %v693 = vld [vmem:[%s238 + $0x50] sm:$0xf]
        %v694 = vld [vmem:[%s238 + $0x54] sm:$0xf]
        %v695 = vld [vmem:[%s238 + $0x58] sm:$0xf]
        %v696 = vld [vmem:[%s238 + $0x5c] sm:$0xf]
        %v697 = vld [vmem:[%s238 + $0x60] sm:$0xf]
        %v698 = vld [vmem:[%s238 + $0x64] sm:$0xf]
        %v699 = vld [vmem:[%s238 + $0x68] sm:$0xf]
        %v700 = vld [vmem:[%s238 + $0x6c] sm:$0xf]
        %v701 = vld [vmem:[%s238 + $0x70] sm:$0xf]
        %v702 = vld [vmem:[%s238 + $0x74] sm:$0xf]
        %v703 = vld [vmem:[%s238 + $0x78] sm:$0xf]
        %v704 = vld [vmem:[%s238 + $0x7c] sm:$0xf]
        %v707 = vunpack.c.l.s4 1966171168
        %v708 = vunpack.c.0.s8 %v707
        %v709 = vlaneseq
        %v710 = vshrl.u32 %v709, 7
        %v711 = vsub.s32 %v708, %v710
        %v712 = vrot.slane %v672, %v711
        %v713 = vcombine.high %v712, %v712
        %v715 = vunpack.c.l.s4 1966171168
        %v716 = vunpack.c.0.s8 %v715
        %v717 = vlaneseq
        %v718 = vshrl.u32 %v717, 7
        %v719 = vsub.s32 %v716, %v718
        %v720 = vrot.slane %v712, %v719
        %v722 = vunpack.c.l.s4 1966171168
        %v723 = vunpack.c.0.s8 %v722
        %v724 = vlaneseq
        %v725 = vshrl.u32 %v724, 7
        %v726 = vsub.s32 %v723, %v725
        %v727 = vrot.slane %v713, %v726
        %v762 = vunpack.c.l.b16 %v673
        %v763 = vunpack.c.l.b16 %v674
        %v764 = vunpack.c.l.b16 %v675
        %v765 = vunpack.c.l.b16 %v676
        %v766 = vunpack.c.l.b16 %v677
        %v767 = vunpack.c.l.b16 %v678
        %v768 = vunpack.c.l.b16 %v679
        %v769 = vunpack.c.l.b16 %v680
        %v770 = vunpack.c.l.b16 %v681
        %v771 = vunpack.c.l.b16 %v682
        %v772 = vunpack.c.l.b16 %v683
        %v773 = vunpack.c.l.b16 %v684
        %v774 = vunpack.c.l.b16 %v685
        %v775 = vunpack.c.l.b16 %v686
        %v776 = vunpack.c.l.b16 %v687
        %v777 = vunpack.c.l.b16 %v688
        %v778 = vunpack.c.l.b16 %v689
        %v779 = vunpack.c.l.b16 %v690
        %v780 = vunpack.c.l.b16 %v691
        %v781 = vunpack.c.l.b16 %v692
        %v782 = vunpack.c.l.b16 %v693
        %v783 = vunpack.c.l.b16 %v694
        %v784 = vunpack.c.l.b16 %v695
        %v785 = vunpack.c.l.b16 %v696
        %v786 = vunpack.c.l.b16 %v697
        %v787 = vunpack.c.l.b16 %v698
        %v788 = vunpack.c.l.b16 %v699
        %v789 = vunpack.c.l.b16 %v700
        %v790 = vunpack.c.l.b16 %v701
        %v791 = vunpack.c.l.b16 %v702
        %v792 = vunpack.c.l.b16 %v703
        %v793 = vunpack.c.l.b16 %v704
        %v794 = vpack.c.b16 %v763, %v762
        %v795 = vpack.c.b16 %v765, %v764
        %v796 = vpack.c.b16 %v767, %v766
        %v797 = vpack.c.b16 %v769, %v768
        %v798 = vpack.c.b16 %v771, %v770
        %v799 = vpack.c.b16 %v773, %v772
        %v800 = vpack.c.b16 %v775, %v774
        %v801 = vpack.c.b16 %v777, %v776
        %v802 = vpack.c.b16 %v779, %v778
        %v803 = vpack.c.b16 %v781, %v780
        %v804 = vpack.c.b16 %v783, %v782
        %v805 = vpack.c.b16 %v785, %v784
        %v806 = vpack.c.b16 %v787, %v786
        %v807 = vpack.c.b16 %v789, %v788
        %v808 = vpack.c.b16 %v791, %v790
        %v809 = vpack.c.b16 %v793, %v792
        %826 = vmatprep.subr.bf16.mxu0 0
        %827 = vmatpush1.bf16.msra.mxu0 %v801
        %828 = vmatprep.subr.bf16.mxu0 0
        %829 = vmatpush1.bf16.msra.mxu0 %v800
        %830 = vmatprep.subr.bf16.mxu0 0
        %831 = vmatpush1.bf16.msra.mxu0 %v799
        %832 = vmatprep.subr.bf16.mxu0 0
        %833 = vmatpush1.bf16.msra.mxu0 %v798
        %834 = vmatprep.subr.bf16.mxu0 0
        %835 = vmatpush1.bf16.msra.mxu0 %v797
        %836 = vmatprep.subr.bf16.mxu0 0
        %837 = vmatpush1.bf16.msra.mxu0 %v796
        %838 = vmatprep.subr.bf16.mxu0 0
        %839 = vmatpush1.bf16.msra.mxu0 %v795
        %840 = vmatprep.subr.bf16.mxu0 0
        %841 = vmatpush1.bf16.msra.mxu0 %v794
        %842 = vmatprep.subr.bf16.mxu0 0
        %843 = vmatpush2.bf16.msra.mxu0 %v809
        %844 = vmatprep.subr.bf16.mxu0 0
        %845 = vmatpush2.bf16.msra.mxu0 %v808
        %846 = vmatprep.subr.bf16.mxu0 0
        %847 = vmatpush2.bf16.msra.mxu0 %v807
        %848 = vmatprep.subr.bf16.mxu0 0
        %849 = vmatpush2.bf16.msra.mxu0 %v806
        %850 = vmatprep.subr.bf16.mxu0 0
        %851 = vmatpush2.bf16.msra.mxu0 %v805
        %852 = vmatprep.subr.bf16.mxu0 0
        %853 = vmatpush2.bf16.msra.mxu0 %v804
        %854 = vmatprep.subr.bf16.mxu0 0
        %855 = vmatpush2.bf16.msra.mxu0 %v803
        %856 = vmatprep.subr.bf16.mxu0 0
        %857 = vmatpush2.bf16.msra.mxu0 %v802
        %858 = vmatprep.mubr.bf16.mxu0 %v727
        %859 = vmatmul.mubr.bf16.gmra.mxu0 %v720
        %v860 = vpop.f32.mrf.mxu0
        %v861 = vadd.f32 0.0, %v860
        %v862 = vpop.f32.mrf.mxu0
        %v863 = vpop.f32.mrf.mxu0
        %v864 = vpop.f32.mrf.mxu0
        %865 = vdwg.mxu0
        %v866 = vadd.f32 %v671, %v861
        %867 = vst [vmem:[#allocation2] sm:$0x1] %v866
        %p868 = scmp.eq.s32.totalorder %s23, 2
        // Predicated region
        $region57: #{tpu_custom_call.1} parent=35 // pred_check
          %p869 = pneg %p868
        $region58: #{tpu_custom_call.1} parent=35 // pred_check_branch
          %871 = sbr.rel (%p869) target = $region60
        $region59: #{tpu_custom_call.1} parent=35 // pred_region
          %v872 = vld [vmem:[#allocation2] sm:$0x1]
          %v873 = vpack.c.bf16 %v872, %v872
          %v874 = vld [vmem:[#allocation3] sm:$0xf]
          %v875 = vld [vmem:[#allocation3 + $0x4] sm:$0xf]
          %v876 = vld [vmem:[#allocation3 + $0x8] sm:$0xf]
          %v877 = vld [vmem:[#allocation3 + $0xc] sm:$0xf]
          %v878 = vld [vmem:[#allocation3 + $0x10] sm:$0xf]
          %v879 = vld [vmem:[#allocation3 + $0x14] sm:$0xf]
          %v880 = vld [vmem:[#allocation3 + $0x18] sm:$0xf]
          %v881 = vld [vmem:[#allocation3 + $0x1c] sm:$0xf]
          %v882 = vld [vmem:[#allocation3 + $0x20] sm:$0xf]
          %v883 = vld [vmem:[#allocation3 + $0x24] sm:$0xf]
          %v884 = vld [vmem:[#allocation3 + $0x28] sm:$0xf]
          %v885 = vld [vmem:[#allocation3 + $0x2c] sm:$0xf]
          %v886 = vld [vmem:[#allocation3 + $0x30] sm:$0xf]
          %v887 = vld [vmem:[#allocation3 + $0x34] sm:$0xf]
          %v888 = vld [vmem:[#allocation3 + $0x38] sm:$0xf]
          %v889 = vld [vmem:[#allocation3 + $0x3c] sm:$0xf]
          %v906 = vunpack.c.l.b16 %v874
          %v907 = vunpack.c.l.b16 %v875
          %v908 = vunpack.c.l.b16 %v876
          %v909 = vunpack.c.l.b16 %v877
          %v910 = vunpack.c.l.b16 %v878
          %v911 = vunpack.c.l.b16 %v879
          %v912 = vunpack.c.l.b16 %v880
          %v913 = vunpack.c.l.b16 %v881
          %v914 = vunpack.c.l.b16 %v882
          %v915 = vunpack.c.l.b16 %v883
          %v916 = vunpack.c.l.b16 %v884
          %v917 = vunpack.c.l.b16 %v885
          %v918 = vunpack.c.l.b16 %v886
          %v919 = vunpack.c.l.b16 %v887
          %v920 = vunpack.c.l.b16 %v888
          %v921 = vunpack.c.l.b16 %v889
          %v922 = vpack.c.b16 %v907, %v906
          %v923 = vpack.c.b16 %v909, %v908
          %v924 = vpack.c.b16 %v911, %v910
          %v925 = vpack.c.b16 %v913, %v912
          %v926 = vpack.c.b16 %v915, %v914
          %v927 = vpack.c.b16 %v917, %v916
          %v928 = vpack.c.b16 %v919, %v918
          %v929 = vpack.c.b16 %v921, %v920
          %938 = vmatprep.subr.bf16.mxu0 0
          %939 = vmatpush1.bf16.xpose.msra.mxu0 %v929
          %940 = vmatprep.subr.bf16.mxu0 0
          %941 = vmatpush1.bf16.xpose.msra.mxu0 %v928
          %942 = vmatprep.subr.bf16.mxu0 0
          %943 = vmatpush1.bf16.xpose.msra.mxu0 %v927
          %944 = vmatprep.subr.bf16.mxu0 0
          %945 = vmatpush1.bf16.xpose.msra.mxu0 %v926
          %946 = vmatprep.subr.bf16.mxu0 0
          %947 = vmatpush1.bf16.xpose.msra.mxu0 %v925
          %948 = vmatprep.subr.bf16.mxu0 0
          %949 = vmatpush1.bf16.xpose.msra.mxu0 %v924
          %950 = vmatprep.subr.bf16.mxu0 0
          %951 = vmatpush1.bf16.xpose.msra.mxu0 %v923
          %952 = vmatprep.subr.bf16.mxu0 0
          %953 = vmatpush1.bf16.xpose.msra.mxu0 %v922
          %954 = vmatprep.subr.bf16.mxu0 0
          %955 = vmatpush2.bf16.xpose.msra.mxu0 0
          %956 = vmatprep.subr.bf16.mxu0 0
          %957 = vmatpush2.bf16.xpose.msra.mxu0 0
          %958 = vmatprep.subr.bf16.mxu0 0
          %959 = vmatpush2.bf16.xpose.msra.mxu0 0
          %960 = vmatprep.subr.bf16.mxu0 0
          %961 = vmatpush2.bf16.xpose.msra.mxu0 0
          %962 = vmatprep.subr.bf16.mxu0 0
          %963 = vmatpush2.bf16.xpose.msra.mxu0 0
          %964 = vmatprep.subr.bf16.mxu0 0
          %965 = vmatpush2.bf16.xpose.msra.mxu0 0
          %966 = vmatprep.subr.bf16.mxu0 0
          %967 = vmatpush2.bf16.xpose.msra.mxu0 0
          %968 = vmatprep.subr.bf16.mxu0 0
          %969 = vmatpush2.bf16.xpose.msra.mxu0 0
          %970 = vmatprep.mubr.bf16.mxu0 0
          %971 = vmatmul.mubr.bf16.gmra.mxu0 %v873
          %v972 = vpop.f32.mrf.mxu0
          %v973 = vadd.f32 0.0, %v972
          %v974 = vpop.f32.mrf.mxu0
          %v975 = vpop.f32.mrf.mxu0
          %v976 = vpop.f32.mrf.mxu0
          %977 = vdwg.mxu0
          %v978 = vmul.f32 %v872, %v872
          %vm979 = vcmask 1040384
          %v980 = vsel %vm979, %v978, 0.0
          %981 = vadd.xlane.f32.xlu0 %v980
          %v982 = vpop.xlane.xlu0 %981
          %v983 = vld [vmem:[#allocation4] sm:$0x1]
          %v984 = vmul.f32 %v983, %v982
          %v985 = vmax.f32 %v984, 1e-16
          %v986 = vrsqrt.pop %v985
          %v987 = vmul.f32 %v973, %v986
          %988 = vst [vmem:[#allocation13] sm:$0x1] %v987
        $region60: #{tpu_custom_call.1} parent=35 // pred_fallthru
          _
        // Predicated region
        $region61: #{tpu_custom_call.1} parent=35 // pred_check
          %p989 = pneg %p130
        $region62: #{tpu_custom_call.1} parent=35 // pred_check_branch
          %991 = sbr.rel (%p989) target = $region64
        $region63: #{tpu_custom_call.1} parent=35 // pred_region
          %s993 = ssub.s32 16, 16
          %994 = vsyncadd [#allocation7], %s993
          %s996 = sshll.u32 [#allocation13], 4
          %s997 = int_to_ptr.vmem [resolvable:$true] %s996
          %999 = dma.vmem_to_hbm [thread:$0]  %s997, 16, %s4, [#allocation7]
        $region64: #{tpu_custom_call.1} parent=35 // pred_fallthru
          _
        // Predicated region
        $region65: #{tpu_custom_call.1} parent=35 // pred_check
          %p1000 = pneg %p130
        $region66: #{tpu_custom_call.1} parent=35 // pred_check_branch
          %1002 = sbr.rel (%p1000) target = $region68
        $region67: #{tpu_custom_call.1} parent=35 // pred_region
          %1003 = dma.done [#allocation7], 16
        $region68: #{tpu_custom_call.1} parent=35 // pred_fallthru
          _
      $region36: #{tpu_custom_call.1} parent=5 // pred_fallthru
        _
      %p1004 = scmp.le.s32.totalorder 2, %s18
      // Predicated region
      $region69: #{tpu_custom_call.1} parent=5 // pred_check
        %p1005 = pneg %p1004
      $region70: #{tpu_custom_call.1} parent=5 // pred_check_branch
        %1007 = sbr.rel (%p1005) target = $region72
      $region71: #{tpu_custom_call.1} parent=5 // pred_region
        %s1008 = ssub.s32 %s18, 2
      $region72: #{tpu_custom_call.1} parent=5 // pred_fallthru
        _
    $region6: #{tpu_custom_call.1} parent=1 // loop_footer
      %s22 = sadd.s32 1, %s18
    $region7: #{tpu_custom_call.1} parent=1 // loop_footer_branch
      %17 = sbr.rel target = $region3
    $region8: #{tpu_custom_call.1} parent=1 // loop_exit
      _
    %1009 = vsyncpa [#allocation6], 1
    %s1010 = scalar_lea.sflag [#allocation6], 1
    %1011 = vsyncpa %s1010, 1
    %1012 = vsyncpa [#allocation9], 1
    %s1013 = scalar_lea.sflag [#allocation9], 1
    %1014 = vsyncpa %s1013, 1
    %1015 = vsyncpa [#allocation12], 1
    %1016 = vsyncpa [#allocation7], 1
    %s1017 = scalar_lea.sflag [#allocation7], 1
    %1018 = vsyncpa %s1017, 1

</llo_original>
